<compile_context>
chip_gen: v6e
topology: v6e:2x2x1
jax: 0.10.0
libtpu: 0.0.40
codegen_flags: <defaults>
</compile_context>

<pallas_src>
import functools

import jax
import jax.numpy as jnp
import numpy as np
from jax import lax
from jax.experimental import pallas as pl
from jax.experimental.pallas import tpu as pltpu

_LANE = 128
_MAX_CHUNKS = 32   # cap on the static per-step unroll (128-lane chunks)
_NACC = 4          # independent partial accumulators (ILP + accuracy)


def _mse_loss_kernel(x_ref, t_ref, m_ref, pos_out, neg_out, *,
                     lane_chunks, tile_n, n_true, num_blocks, grid_j):
    p = pl.program_id(0)
    j = pl.program_id(1)
    block_id = p * grid_j + j

    @pl.when(j == 0)
    def _init():
        pos_out[...] = jnp.zeros_like(pos_out)
        neg_out[...] = jnp.zeros_like(neg_out)

    # Skip the (possible) extra megacore tail step: its input block index is
    # clamped in the index_map, its contribution must not be added.
    @pl.when(block_id < num_blocks)
    def _accumulate():
        b = x_ref.shape[0]
        base = block_id * tile_n  # global column offset of this block
        lane = lax.broadcasted_iota(jnp.int32, (b, _LANE), 1)

        def chunk_terms(c):
            lo = c * _LANE  # static, lane-aligned offset
            x = x_ref[:, pl.ds(lo, _LANE)].astype(jnp.float32)
            t = t_ref[:, pl.ds(lo, _LANE)].astype(jnp.float32)
            m = m_ref[:, pl.ds(lo, _LANE)]
            pos_id = (m == 1).astype(jnp.float32)
            neg_id = (m == 0).astype(jnp.float32)
            d = x - t
            pos_t = pos_id * d * d
            neg_t = neg_id * x * x
            # Only chunks that can overhang the true column count (in the
            # last block) need the validity select; decided statically.
            # Tail data beyond N is unspecified, so BOTH terms are zeroed.
            if (num_blocks - 1) * tile_n + lo + _LANE > n_true:
                valid = (base + lo + lane) < n_true
                pos_t = jnp.where(valid, pos_t, 0.0)
                neg_t = jnp.where(valid, neg_t, 0.0)
            return pos_t, neg_t

        # Round-robin over a few independent accumulators: keeps the VALU add
        # chain short (lane_chunks/_NACC deep) and reduces f32 rounding.
        nacc = min(_NACC, lane_chunks)
        pos_acc = [None] * nacc
        neg_acc = [None] * nacc
        for c in range(lane_chunks):
            pt, nt = chunk_terms(c)
            a = c % nacc
            if pos_acc[a] is None:
                pos_acc[a], neg_acc[a] = pt, nt
            else:
                pos_acc[a] = pos_acc[a] + pt
                neg_acc[a] = neg_acc[a] + nt
        pos_sum, neg_sum = pos_acc[0], neg_acc[0]
        for a in range(1, nacc):
            pos_sum = pos_sum + pos_acc[a]
            neg_sum = neg_sum + neg_acc[a]

        pos_out[...] += pos_sum[None]
        neg_out[...] += neg_sum[None]


def _vmem_budget():
    """(max_block_bytes, vmem_limit_bytes), sized per TPU generation."""
    cap = 64 * 1024 * 1024
    try:
        info = pltpu.get_tpu_info()
        c = getattr(info, "vmem_capacity_bytes", None)
        if c:
            cap = int(c)
    except Exception:
        pass
    if cap >= 100 * 1024 * 1024:            # v5e / v6e: 128 MiB physical VMEM
        return 8 * 1024 * 1024, 96 * 1024 * 1024
    return 4 * 1024 * 1024, 48 * 1024 * 1024  # v7x: 64 MiB physical VMEM


def _pick_tile_n(B, N, max_block_bytes):
    """Feature-tile width: as large as the VMEM budget / unroll cap allows,
    never larger than the (128-rounded) true feature count.  No divisor hunt:
    ragged tails are handled inside the kernel."""
    budget_lanes = max(1, max_block_bytes // (4 * max(B, 1)))   # f32 per-block
    budget_lanes = max(_LANE, (budget_lanes // _LANE) * _LANE)
    n_round = pl.cdiv(N, _LANE) * _LANE
    return min(budget_lanes, _MAX_CHUNKS * _LANE, n_round)


def mse_loss(inputs, targets, mask, *, reduction="mean", _tile_lanes=None):
    """Masked MSE loss. inputs/targets: (B, N) float (f32 or bf16);
    mask: (B, N), any dtype with exact 0/1 values (int8/bool cuts HBM traffic).

    Returns (pos_loss, neg_loss) scalars (reduction='mean', divide by B only).
    """
    assert reduction == "mean", "only the default 'mean' reduction is implemented"
    # TODO(synk): reduction='none' (elementwise loss tensors) not implemented.
    B, N = inputs.shape
    assert targets.shape == (B, N) and mask.shape == (B, N)

    max_block_bytes, vmem_limit = _vmem_budget()
    tile_n = _tile_lanes if _tile_lanes is not None else _pick_tile_n(B, N, max_block_bytes)
    num_blocks = pl.cdiv(N, tile_n)

    # Always split the leading ("parallel") axis 2-way when there is enough
    # work, regardless of block-count parity: the extra tail step (if any) is
    # clamped + skipped in-kernel.  v7x shards it over both TensorCores.
    P = 2 if num_blocks >= 2 else 1
    J = pl.cdiv(num_blocks, P)
    last = num_blocks - 1

    kernel = functools.partial(
        _mse_loss_kernel,
        lane_chunks=tile_n // _LANE, tile_n=tile_n, n_true=N,
        num_blocks=num_blocks, grid_j=J)

    def in_index(p, j):
        return (0, jnp.minimum(p * J + j, last))

    in_spec = pl.BlockSpec((B, tile_n), in_index)
    out_spec = pl.BlockSpec((1, B, _LANE), lambda p, j: (p, 0, 0))
    out_shape = jax.ShapeDtypeStruct((P, B, _LANE), jnp.float32)

    pos_part, neg_part = pl.pallas_call(
        kernel,
        out_shape=(out_shape, out_shape),
        grid_spec=pltpu.PrefetchScalarGridSpec(
            num_scalar_prefetch=0,
            grid=(P, J),
            in_specs=[in_spec, in_spec, in_spec],
            out_specs=(out_spec, out_spec),
        ),
        compiler_params=pltpu.CompilerParams(
            dimension_semantics=("parallel", "arbitrary"),
            vmem_limit_bytes=vmem_limit,
        ),
    )(inputs, targets, mask)

    inv_b = 1.0 / float(B)
    pos_loss = jnp.sum(pos_part) * inv_b
    neg_loss = jnp.sum(neg_part) * inv_b
    return pos_loss, neg_loss


def _reference(inputs, targets, mask):
    pos_id = (mask == 1.0).astype(jnp.float32)
    neg_id = (mask == 0.0).astype(jnp.float32)
    x = inputs.astype(jnp.float32)
    t = targets.astype(jnp.float32)
    pos_loss = pos_id * (x - t) ** 2
    neg_loss = neg_id * x ** 2
    return (jnp.mean(jnp.sum(pos_loss, axis=1)),
            jnp.mean(jnp.sum(neg_loss, axis=1)))


if __name__ == "__main__":
    key = jax.random.PRNGKey(0)
    k1, k2, k3 = jax.random.split(key, 3)

    def check(B, N, mask_dtype, tile_lanes=None):
        inputs = jax.random.normal(k1, (B, N), dtype=jnp.float32)
        targets = jax.random.normal(k2, (B, N), dtype=jnp.float32)
        mask01 = jax.random.uniform(k3, (B, N)) > 0.5
        mask = mask01.astype(mask_dtype)
        pos, neg = mse_loss(inputs, targets, mask, _tile_lanes=tile_lanes)
        jax.block_until_ready((pos, neg))
        ref_pos, ref_neg = _reference(inputs, targets, mask01.astype(jnp.float32))
        np.testing.assert_allclose(np.asarray(pos), np.asarray(ref_pos),
                                   rtol=1e-5, atol=1e-4)
        np.testing.assert_allclose(np.asarray(neg), np.asarray(ref_neg),
                                   rtol=1e-5, atol=1e-4)

    # Small, lane-aligned case (single block).
    check(8, 256, jnp.float32)
    # Ragged feature count (in-kernel tail masking) + int8 mask (narrow HBM).
    check(4, 200, jnp.int8)
    # Odd block count with a forced small tile: exercises the clamped 2-way
    # megacore split together with the ragged tail.
    check(8, 712, jnp.float32, tile_lanes=256)

    print("KERNEL_OK")
</pallas_src>

<mosaic_0001>
module attributes {stable_mosaic.version = 11 : i64} {
  func.func @_mse_loss_kernel(%arg0: i32, %arg1: i32, %arg2: memref<8x256xf32, #tpu.memory_space<vmem>>, %arg3: memref<8x256xf32, #tpu.memory_space<vmem>>, %arg4: memref<8x256xf32, #tpu.memory_space<vmem>>, %arg5: memref<1x8x128xf32, #tpu.memory_space<vmem>>, %arg6: memref<1x8x128xf32, #tpu.memory_space<vmem>>) attributes {dimension_semantics = [#tpu.dimension_semantics<parallel>, #tpu.dimension_semantics<arbitrary>], iteration_bounds = array<i64: 1, 1>, scalar_prefetch = 0 : i64, scratch_operands = 0 : i64, tpu.core_type = #tpu.core_type<tc>, window_params = [{transform_indices = @transform_0, window_bounds = array<i64: 8, 256>}, {transform_indices = @transform_1, window_bounds = array<i64: 8, 256>}, {transform_indices = @transform_2, window_bounds = array<i64: 8, 256>}, {transform_indices = @transform_3, window_bounds = array<i64: 1, 8, 128>}, {transform_indices = @transform_4, window_bounds = array<i64: 1, 8, 128>}]} {
    %c1_i32 = arith.constant 1 : i32
    %0 = arith.muli %arg0, %c1_i32 : i32
    %1 = arith.addi %0, %arg1 : i32
    %c0_i32 = arith.constant 0 : i32
    %2 = arith.cmpi eq, %arg1, %c0_i32 : i32
    %3 = arith.extui %2 : i1 to i32
    %c0_i32_0 = arith.constant 0 : i32
    %4 = arith.cmpi ne, %3, %c0_i32_0 : i32
    scf.if %4 {
      %cst = arith.constant 0.000000e+00 : f32
      %8 = vector.broadcast %cst : f32 to vector<1x8x128xf32>
      %c0 = arith.constant 0 : index
      %c0_3 = arith.constant 0 : index
      %c0_4 = arith.constant 0 : index
      %9 = vector.load %arg5[%c0, %c0_3, %c0_4] : memref<1x8x128xf32, #tpu.memory_space<vmem>>, vector<1x8x128xf32>
      tpu.vector_store %arg5[%c0, %c0_3, %c0_4], %8 {strides = array<i32>} : memref<1x8x128xf32, #tpu.memory_space<vmem>>, vector<1x8x128xf32>,
      %cst_5 = arith.constant 0.000000e+00 : f32
      %10 = vector.broadcast %cst_5 : f32 to vector<1x8x128xf32>
      %c0_6 = arith.constant 0 : index
      %c0_7 = arith.constant 0 : index
      %c0_8 = arith.constant 0 : index
      %11 = vector.load %arg6[%c0_6, %c0_7, %c0_8] : memref<1x8x128xf32, #tpu.memory_space<vmem>>, vector<1x8x128xf32>
      tpu.vector_store %arg6[%c0_6, %c0_7, %c0_8], %10 {strides = array<i32>} : memref<1x8x128xf32, #tpu.memory_space<vmem>>, vector<1x8x128xf32>,
    } else {
    }
    %c1_i32_1 = arith.constant 1 : i32
    %5 = arith.cmpi slt, %1, %c1_i32_1 : i32
    %6 = arith.extui %5 : i1 to i32
    %c0_i32_2 = arith.constant 0 : i32
    %7 = arith.cmpi ne, %6, %c0_i32_2 : i32
    scf.if %7 {
      %c0 = arith.constant 0 : index
      %c0_3 = arith.constant 0 : index
      %8 = vector.load %arg2[%c0, %c0_3] : memref<8x256xf32, #tpu.memory_space<vmem>>, vector<8x128xf32>
      %c0_4 = arith.constant 0 : index
      %c0_5 = arith.constant 0 : index
      %9 = vector.load %arg3[%c0_4, %c0_5] : memref<8x256xf32, #tpu.memory_space<vmem>>, vector<8x128xf32>
      %c0_6 = arith.constant 0 : index
      %c0_7 = arith.constant 0 : index
      %10 = vector.load %arg4[%c0_6, %c0_7] : memref<8x256xf32, #tpu.memory_space<vmem>>, vector<8x128xf32>
      %cst = arith.constant 1.000000e+00 : f32
      %11 = vector.broadcast %cst : f32 to vector<8x128xf32>
      %12 = arith.cmpf oeq, %10, %11 : vector<8x128xf32>
      %13 = arith.extui %12 : vector<8x128xi1> to vector<8x128xi32>
      %14 = arith.sitofp %13 : vector<8x128xi32> to vector<8x128xf32>
      %cst_8 = arith.constant 0.000000e+00 : f32
      %15 = vector.broadcast %cst_8 : f32 to vector<8x128xf32>
      %16 = arith.cmpf oeq, %10, %15 : vector<8x128xf32>
      %17 = arith.extui %16 : vector<8x128xi1> to vector<8x128xi32>
      %18 = arith.sitofp %17 : vector<8x128xi32> to vector<8x128xf32>
      %19 = arith.subf %8, %9 : vector<8x128xf32>
      %20 = arith.mulf %14, %19 : vector<8x128xf32>
      %21 = arith.mulf %20, %19 : vector<8x128xf32>
      %22 = arith.mulf %18, %8 : vector<8x128xf32>
      %23 = arith.mulf %22, %8 : vector<8x128xf32>
      %c0_9 = arith.constant 0 : index
      %c128 = arith.constant 128 : index
      %24 = vector.load %arg2[%c0_9, %c128] : memref<8x256xf32, #tpu.memory_space<vmem>>, vector<8x128xf32>
      %c0_10 = arith.constant 0 : index
      %c128_11 = arith.constant 128 : index
      %25 = vector.load %arg3[%c0_10, %c128_11] : memref<8x256xf32, #tpu.memory_space<vmem>>, vector<8x128xf32>
      %c0_12 = arith.constant 0 : index
      %c128_13 = arith.constant 128 : index
      %26 = vector.load %arg4[%c0_12, %c128_13] : memref<8x256xf32, #tpu.memory_space<vmem>>, vector<8x128xf32>
      %cst_14 = arith.constant 1.000000e+00 : f32
      %27 = vector.broadcast %cst_14 : f32 to vector<8x128xf32>
      %28 = arith.cmpf oeq, %26, %27 : vector<8x128xf32>
      %29 = arith.extui %28 : vector<8x128xi1> to vector<8x128xi32>
      %30 = arith.sitofp %29 : vector<8x128xi32> to vector<8x128xf32>
      %cst_15 = arith.constant 0.000000e+00 : f32
      %31 = vector.broadcast %cst_15 : f32 to vector<8x128xf32>
      %32 = arith.cmpf oeq, %26, %31 : vector<8x128xf32>
      %33 = arith.extui %32 : vector<8x128xi1> to vector<8x128xi32>
      %34 = arith.sitofp %33 : vector<8x128xi32> to vector<8x128xf32>
      %35 = arith.subf %24, %25 : vector<8x128xf32>
      %36 = arith.mulf %30, %35 : vector<8x128xf32>
      %37 = arith.mulf %36, %35 : vector<8x128xf32>
      %38 = arith.mulf %34, %24 : vector<8x128xf32>
      %39 = arith.mulf %38, %24 : vector<8x128xf32>
      %40 = arith.addf %21, %37 : vector<8x128xf32>
      %41 = arith.addf %23, %39 : vector<8x128xf32>
      %c0_16 = arith.constant 0 : index
      %c0_17 = arith.constant 0 : index
      %c0_18 = arith.constant 0 : index
      %42 = vector.load %arg5[%c0_16, %c0_17, %c0_18] : memref<1x8x128xf32, #tpu.memory_space<vmem>>, vector<1x8x128xf32>
      %43 = vector.shape_cast %40 : vector<8x128xf32> to vector<1x8x128xf32>
      %44 = arith.addf %42, %43 : vector<1x8x128xf32>
      %c0_19 = arith.constant 0 : index
      %c0_20 = arith.constant 0 : index
      %c0_21 = arith.constant 0 : index
      %45 = vector.load %arg5[%c0_19, %c0_20, %c0_21] : memref<1x8x128xf32, #tpu.memory_space<vmem>>, vector<1x8x128xf32>
      tpu.vector_store %arg5[%c0_19, %c0_20, %c0_21], %44 {strides = array<i32>} : memref<1x8x128xf32, #tpu.memory_space<vmem>>, vector<1x8x128xf32>,
      %c0_22 = arith.constant 0 : index
      %c0_23 = arith.constant 0 : index
      %c0_24 = arith.constant 0 : index
      %46 = vector.load %arg6[%c0_22, %c0_23, %c0_24] : memref<1x8x128xf32, #tpu.memory_space<vmem>>, vector<1x8x128xf32>
      %47 = vector.shape_cast %41 : vector<8x128xf32> to vector<1x8x128xf32>
      %48 = arith.addf %46, %47 : vector<1x8x128xf32>
      %c0_25 = arith.constant 0 : index
      %c0_26 = arith.constant 0 : index
      %c0_27 = arith.constant 0 : index
      %49 = vector.load %arg6[%c0_25, %c0_26, %c0_27] : memref<1x8x128xf32, #tpu.memory_space<vmem>>, vector<1x8x128xf32>
      tpu.vector_store %arg6[%c0_25, %c0_26, %c0_27], %48 {strides = array<i32>} : memref<1x8x128xf32, #tpu.memory_space<vmem>>, vector<1x8x128xf32>,
    } else {
    }
    return
  }
  func.func @transform_0(%arg0: i32, %arg1: i32) -> (i32, i32) {
    %c1_i32 = arith.constant 1 : i32
    %0 = arith.muli %arg0, %c1_i32 : i32
    %1 = arith.addi %0, %arg1 : i32
    %c0_i32 = arith.constant 0 : i32
    %2 = arith.minsi %1, %c0_i32 : i32
    %c0_i32_0 = arith.constant 0 : i32
    %c0_i32_1 = arith.constant 0 : i32
    return %c0_i32_0, %2 : i32, i32
  }
  func.func @transform_1(%arg0: i32, %arg1: i32) -> (i32, i32) {
    %c1_i32 = arith.constant 1 : i32
    %0 = arith.muli %arg0, %c1_i32 : i32
    %1 = arith.addi %0, %arg1 : i32
    %c0_i32 = arith.constant 0 : i32
    %2 = arith.minsi %1, %c0_i32 : i32
    %c0_i32_0 = arith.constant 0 : i32
    %c0_i32_1 = arith.constant 0 : i32
    return %c0_i32_0, %2 : i32, i32
  }
  func.func @transform_2(%arg0: i32, %arg1: i32) -> (i32, i32) {
    %c1_i32 = arith.constant 1 : i32
    %0 = arith.muli %arg0, %c1_i32 : i32
    %1 = arith.addi %0, %arg1 : i32
    %c0_i32 = arith.constant 0 : i32
    %2 = arith.minsi %1, %c0_i32 : i32
    %c0_i32_0 = arith.constant 0 : i32
    %c0_i32_1 = arith.constant 0 : i32
    return %c0_i32_0, %2 : i32, i32
  }
  func.func @transform_3(%arg0: i32, %arg1: i32) -> (i32, i32, i32) {
    %c0_i32 = arith.constant 0 : i32
    %c0_i32_0 = arith.constant 0 : i32
    %c0_i32_1 = arith.constant 0 : i32
    return %arg0, %c0_i32, %c0_i32_0 : i32, i32, i32
  }
  func.func @transform_4(%arg0: i32, %arg1: i32) -> (i32, i32, i32) {
    %c0_i32 = arith.constant 0 : i32
    %c0_i32_0 = arith.constant 0 : i32
    %c0_i32_1 = arith.constant 0 : i32
    return %arg0, %c0_i32, %c0_i32_0 : i32, i32, i32
  }
}

</mosaic_0001>

<llo_original>
// kernel: tpu_custom_call.1
$region0: #{tpu_custom_call.1}
  #allocation0 [shape = 'u32[]', space=smem, size = 0x4, offset = 0x4, fixed_abs, tag = 'smem constant byte address 0x4 - core index']
  #allocation1 [shape = 'u32[144,128]{1,0:T(1,128)}', space=vmem, size = 0x12000, scoped, tag = 'internal scratch']
  %s0 = inlined_call_operand.hbm [shape: f32[8,256], index: 0, kind: input, shape index: {}]
  %s1 = inlined_call_operand.hbm [shape: f32[8,256], index: 1, kind: input, shape index: {}]
  %s2 = inlined_call_operand.hbm [shape: f32[8,256], index: 2, kind: input, shape index: {}]
  %s3 = inlined_call_operand.hbm [shape: f32[1,8,128], index: 3, kind: output, shape index: {0}]
  %s4 = inlined_call_operand.hbm [shape: f32[1,8,128], index: 4, kind: output, shape index: {1}]
  %5 = xla_tuple %s3, %s4
  %s6 = sld [smem:[#allocation0]]
  $region50: #{tpu_custom_call.1} parent=0
    _
  %s8 = ssub.s32 1, %s6
  %s9 = scalar_select 0, %s8, %s6
  $region1: #{tpu_custom_call.1} parent=0
    #allocation2 [shape = 'u8[8192]{0}', space=vmem, size = 0x2000, scoped, tag = 'input window, operand 0, single buffered']
    #allocation3 [shape = 's32[1]{0}', space=sflag, size = 0x4, scoped, tag = 'scoped memory for tpu_custom_call.1']
    #allocation4 [shape = 's32[1]{0}', space=sflag, size = 0x4, scoped, tag = 'scoped memory for tpu_custom_call.1']
    #allocation5 [shape = 'u8[8192]{0}', space=vmem, size = 0x2000, scoped, tag = 'input window, operand 1, single buffered']
    #allocation6 [shape = 's32[1]{0}', space=sflag, size = 0x4, scoped, tag = 'scoped memory for tpu_custom_call.1']
    #allocation7 [shape = 'u8[8192]{0}', space=vmem, size = 0x2000, scoped, tag = 'input window, operand 2, single buffered']
    #allocation8 [shape = 'u8[4096]{0}', space=vmem, size = 0x1000, scoped, tag = 'output window, operand 0, single buffered']
    #allocation9 [shape = 'u8[4096]{0}', space=vmem, size = 0x1000, scoped, tag = 'output window, operand 1, single buffered']
    #allocation10 [shape = 's32[1]{0}', space=sflag, size = 0x4, scoped, tag = 'scoped memory for tpu_custom_call.1']
    %10 = vsyncpa [#allocation3], 0
    %11 = vsyncpa [#allocation6], 0
    %12 = vsyncpa [#allocation4], 0
    %13 = vsyncpa [#allocation10], 0
    // Predicated region
    $region2: #{tpu_custom_call.1} parent=1 // pred_check
      _
    $region3: #{tpu_custom_call.1} parent=1 // pred_check_branch
      %15 = sbr.rel (0) target = $region5
    $region4: #{tpu_custom_call.1} parent=1 // pred_region
      %s16 = sadd.s32 0, 0
      %p17 = scmp.lt.s32.totalorder %s16, 0
      %s18 = scalar_select %p17, %s16, 0
      %s19 = smul.u32 2, %s18
      %s21 = ssub.s32 256, 256
      %22 = vsyncadd [#allocation3], %s21
      %s23 = smul.addr %s19, 128
      %s24 = scalar_lea.hbm %s0, %s23
      %s26 = sshll.u32 [#allocation2], 4
      %s27 = int_to_ptr.vmem [resolvable:$true] %s26
      %29 = dma.hbm_to_vmem [thread:$0]  %s24, 256, %s27, [#allocation3]
    $region5: #{tpu_custom_call.1} parent=1 // pred_fallthru
      _
    // Predicated region
    $region6: #{tpu_custom_call.1} parent=1 // pred_check
      _
    $region7: #{tpu_custom_call.1} parent=1 // pred_check_branch
      %31 = sbr.rel (0) target = $region9
    $region8: #{tpu_custom_call.1} parent=1 // pred_region
      %s32 = sadd.s32 0, 0
      %p33 = scmp.lt.s32.totalorder %s32, 0
      %s34 = scalar_select %p33, %s32, 0
      %s35 = smul.u32 2, %s34
      %s37 = ssub.s32 256, 256
      %38 = vsyncadd [#allocation6], %s37
      %s39 = smul.addr %s35, 128
      %s40 = scalar_lea.hbm %s1, %s39
      %s42 = sshll.u32 [#allocation5], 4
      %s43 = int_to_ptr.vmem [resolvable:$true] %s42
      %45 = dma.hbm_to_vmem [thread:$0]  %s40, 256, %s43, [#allocation6]
    $region9: #{tpu_custom_call.1} parent=1 // pred_fallthru
      _
    // Predicated region
    $region10: #{tpu_custom_call.1} parent=1 // pred_check
      _
    $region11: #{tpu_custom_call.1} parent=1 // pred_check_branch
      %47 = sbr.rel (0) target = $region13
    $region12: #{tpu_custom_call.1} parent=1 // pred_region
      %s48 = sadd.s32 0, 0
      %p49 = scmp.lt.s32.totalorder %s48, 0
      %s50 = scalar_select %p49, %s48, 0
      %s51 = smul.u32 2, %s50
      %s53 = ssub.s32 256, 256
      %54 = vsyncadd [#allocation6], %s53
      %s55 = smul.addr %s51, 128
      %s56 = scalar_lea.hbm %s2, %s55
      %s58 = sshll.u32 [#allocation7], 4
      %s59 = int_to_ptr.vmem [resolvable:$true] %s58
      %61 = dma.hbm_to_vmem [thread:$0]  %s56, 256, %s59, [#allocation6]
    $region13: #{tpu_custom_call.1} parent=1 // pred_fallthru
      _
    // Predicated region
    $region14: #{tpu_custom_call.1} parent=1 // pred_check
      _
    $region15: #{tpu_custom_call.1} parent=1 // pred_check_branch
      %63 = sbr.rel (0) target = $region17
    $region16: #{tpu_custom_call.1} parent=1 // pred_region
      %64 = dma.done [#allocation3], 256
    $region17: #{tpu_custom_call.1} parent=1 // pred_fallthru
      _
    // Predicated region
    $region18: #{tpu_custom_call.1} parent=1 // pred_check
      _
    $region19: #{tpu_custom_call.1} parent=1 // pred_check_branch
      %66 = sbr.rel (0) target = $region21
    $region20: #{tpu_custom_call.1} parent=1 // pred_region
      %67 = dma.done [#allocation6], 256
    $region21: #{tpu_custom_call.1} parent=1 // pred_fallthru
      _
    // Predicated region
    $region22: #{tpu_custom_call.1} parent=1 // pred_check
      _
    $region23: #{tpu_custom_call.1} parent=1 // pred_check_branch
      %69 = sbr.rel (0) target = $region25
    $region24: #{tpu_custom_call.1} parent=1 // pred_region
      %70 = dma.done [#allocation6], 256
    $region25: #{tpu_custom_call.1} parent=1 // pred_fallthru
      _
    %s71 = sadd.s32 0, 0
    %p72 = scmp.lt.s32.totalorder %s71, 0
    %s73 = scalar_select %p72, %s71, 0
    %s74 = smul.u32 2, %s73
    %s75 = sadd.s32 0, 0
    %p76 = scmp.lt.s32.totalorder %s75, 0
    %s77 = scalar_select %p76, %s75, 0
    %s78 = smul.u32 2, %s77
    %s79 = sadd.s32 0, 0
    %p80 = scmp.lt.s32.totalorder %s79, 0
    %s81 = scalar_select %p80, %s79, 0
    %s82 = smul.u32 2, %s81
    %s83 = sadd.s32 0, 0
    %p84 = scmp.eq.s32.totalorder 0, 0
    // Predicated region
    $region26: #{tpu_custom_call.1} parent=1 // pred_check
      %p85 = pneg %p84
    $region27: #{tpu_custom_call.1} parent=1 // pred_check_branch
      %87 = sbr.rel (%p85) target = $region29
    $region28: #{tpu_custom_call.1} parent=1 // pred_region
      %88 = vst [vmem:[#allocation8] sm:$0xff] 0.0
      %89 = vst [vmem:[#allocation9] sm:$0xff] 0.0
    $region29: #{tpu_custom_call.1} parent=1 // pred_fallthru
      _
    %p90 = scmp.lt.s32.totalorder %s83, 1
    // Predicated region
    $region30: #{tpu_custom_call.1} parent=1 // pred_check
      %p91 = pneg %p90
    $region31: #{tpu_custom_call.1} parent=1 // pred_check_branch
      %93 = sbr.rel (%p91) target = $region33
    $region32: #{tpu_custom_call.1} parent=1 // pred_region
      %v94 = vld [vmem:[#allocation2] sm:$0xff]
      %v95 = vld [vmem:[#allocation5] sm:$0xff]
      %v96 = vld [vmem:[#allocation7] sm:$0xff]
      %vm97 = vcmp.eq.f32.partialorder %v96, 1.0
      %v98 = vsel %vm97, 1, 0
      %v99 = vcvt.s32.f32 %v98
      %vm100 = vcmp.eq.f32.partialorder %v96, 0.0
      %v101 = vsel %vm100, 1, 0
      %v102 = vcvt.s32.f32 %v101
      %v103 = vsub.f32 %v94, %v95
      %v104 = vmul.f32 %v99, %v103
      %v105 = vmul.f32 %v104, %v103
      %v106 = vmul.f32 %v102, %v94
      %v107 = vmul.f32 %v106, %v94
      %v108 = vld [vmem:[#allocation2 + $0x8] sm:$0xff]
      %v109 = vld [vmem:[#allocation5 + $0x8] sm:$0xff]
      %v110 = vld [vmem:[#allocation7 + $0x8] sm:$0xff]
      %vm111 = vcmp.eq.f32.partialorder %v110, 1.0
      %v112 = vsel %vm111, 1, 0
      %v113 = vcvt.s32.f32 %v112
      %vm114 = vcmp.eq.f32.partialorder %v110, 0.0
      %v115 = vsel %vm114, 1, 0
      %v116 = vcvt.s32.f32 %v115
      %v117 = vsub.f32 %v108, %v109
      %v118 = vmul.f32 %v113, %v117
      %v119 = vmul.f32 %v118, %v117
      %v120 = vmul.f32 %v116, %v108
      %v121 = vmul.f32 %v120, %v108
      %v122 = vadd.f32 %v105, %v119
      %v123 = vadd.f32 %v107, %v121
      %v124 = vld [vmem:[#allocation8] sm:$0xff]
      %v125 = vadd.f32 %v124, %v122
      %126 = vst [vmem:[#allocation8] sm:$0xff] %v125
      %v127 = vld [vmem:[#allocation9] sm:$0xff]
      %v128 = vadd.f32 %v127, %v123
      %129 = vst [vmem:[#allocation9] sm:$0xff] %v128
    $region33: #{tpu_custom_call.1} parent=1 // pred_fallthru
      _
    // Predicated region
    $region34: #{tpu_custom_call.1} parent=1 // pred_check
      _
    $region35: #{tpu_custom_call.1} parent=1 // pred_check_branch
      %131 = sbr.rel (0) target = $region37
    $region36: #{tpu_custom_call.1} parent=1 // pred_region
      %s133 = ssub.s32 128, 128
      %134 = vsyncadd [#allocation4], %s133
      %s136 = sshll.u32 [#allocation8], 4
      %s137 = int_to_ptr.vmem [resolvable:$true] %s136
      %139 = dma.vmem_to_hbm [thread:$0]  %s137, 128, %s3, [#allocation4]
    $region37: #{tpu_custom_call.1} parent=1 // pred_fallthru
      _
    // Predicated region
    $region38: #{tpu_custom_call.1} parent=1 // pred_check
      _
    $region39: #{tpu_custom_call.1} parent=1 // pred_check_branch
      %141 = sbr.rel (0) target = $region41
    $region40: #{tpu_custom_call.1} parent=1 // pred_region
      %s143 = ssub.s32 128, 128
      %144 = vsyncadd [#allocation10], %s143
      %s146 = sshll.u32 [#allocation9], 4
      %s147 = int_to_ptr.vmem [resolvable:$true] %s146
      %149 = dma.vmem_to_hbm [thread:$0]  %s147, 128, %s4, [#allocation10]
    $region41: #{tpu_custom_call.1} parent=1 // pred_fallthru
      _
    // Predicated region
    $region42: #{tpu_custom_call.1} parent=1 // pred_check
      _
    $region43: #{tpu_custom_call.1} parent=1 // pred_check_branch
      %151 = sbr.rel (0) target = $region45
    $region44: #{tpu_custom_call.1} parent=1 // pred_region
      %152 = dma.done [#allocation4], 128
    $region45: #{tpu_custom_call.1} parent=1 // pred_fallthru
      _
    // Predicated region
    $region46: #{tpu_custom_call.1} parent=1 // pred_check
      _
    $region47: #{tpu_custom_call.1} parent=1 // pred_check_branch
      %154 = sbr.rel (0) target = $region49
    $region48: #{tpu_custom_call.1} parent=1 // pred_region
      %155 = dma.done [#allocation10], 128
    $region49: #{tpu_custom_call.1} parent=1 // pred_fallthru
      _
    %156 = vsyncpa [#allocation3], 1
    %157 = vsyncpa [#allocation6], 1
    %158 = vsyncpa [#allocation4], 1
    %159 = vsyncpa [#allocation10], 1

</llo_original>
